<compile_context>
chip_gen: v7x
topology: tpu7x:2x2x1
jax: 0.10.0
libtpu: 0.0.40
codegen_flags: <defaults>
</compile_context>

<pallas_src>
import jax
import jax.numpy as jnp
from jax.experimental import pallas as pl
from jax.experimental.pallas import tpu as pltpu

BN_EPS = 1e-5  # nn.BatchNorm1d default eps


def mlp_kernel(x_ref, w1_ref, b1_ref, gamma_ref, beta_ref, w2_ref, b2_ref, o_ref):
    # ---- layer1: Linear(in_dim -> hidden_dim) ----
    # x / W1 are bf16 MXU operands; accumulate in f32.
    h = jnp.dot(x_ref[...], w1_ref[...],
                preferred_element_type=jnp.float32) + b1_ref[...]

    # ---- BatchNorm1d (training mode: batch stats, biased variance), f32 ----
    mean = jnp.mean(h, axis=0, keepdims=True)
    var = jnp.mean((h - mean) ** 2, axis=0, keepdims=True)
    h = (h - mean) * jax.lax.rsqrt(var + BN_EPS)          # rsqrt -> EUP slot
    h = gamma_ref[...] * h + beta_ref[...]

    # ---- ReLU ----
    h = jnp.maximum(h, 0.0)

    # ---- layer2: Linear(hidden_dim -> out_dim) ----
    y = jnp.dot(h.astype(jnp.bfloat16), w2_ref[...],
                preferred_element_type=jnp.float32) + b2_ref[...]
    o_ref[...] = y


def mlp_forward(x, params):
    """x: (B, in_dim) float32. params: (w1, b1, gamma, beta, w2, b2).

    Weights are stored as (fan_in, fan_out) so the kernel computes x @ W + b,
    numerically identical to PyTorch's x @ W.T + b with W of shape (out, in).
    """
    w1, b1, gamma, beta, w2, b2 = params
    B = x.shape[0]
    out_dim = w2.shape[1]

    # bf16 only for MXU operands; biases / BN affine params stay f32.
    args = (x.astype(jnp.bfloat16),
            w1.astype(jnp.bfloat16), b1, gamma, beta,
            w2.astype(jnp.bfloat16), b2)

    return pl.pallas_call(
        mlp_kernel,
        out_shape=jax.ShapeDtypeStruct((B, out_dim), jnp.float32),
        in_specs=[pl.BlockSpec(memory_space=pltpu.MemorySpace.VMEM)] * len(args),
        out_specs=pl.BlockSpec(memory_space=pltpu.MemorySpace.VMEM),
    )(*args)


def _linear_init(key, fan_in, fan_out):
    # PyTorch nn.Linear default init: U(-1/sqrt(fan_in), +1/sqrt(fan_in))
    kw, kb = jax.random.split(key)
    bound = 1.0 / jnp.sqrt(float(fan_in))
    w = jax.random.uniform(kw, (fan_in, fan_out), jnp.float32, -bound, bound)
    b = jax.random.uniform(kb, (1, fan_out), jnp.float32, -bound, bound)
    return w, b


def make_params(key, in_dim, hidden_dim, out_dim):
    k1, k2 = jax.random.split(key)
    w1, b1 = _linear_init(k1, in_dim, hidden_dim)
    gamma = jnp.ones((1, hidden_dim), jnp.float32)   # BN affine weight
    beta = jnp.zeros((1, hidden_dim), jnp.float32)   # BN affine bias
    w2, b2 = _linear_init(k2, hidden_dim, out_dim)
    return (w1, b1, gamma, beta, w2, b2)


def mlp_reference(x, params):
    """Pure-JAX f32 reference of the same forward pass."""
    w1, b1, gamma, beta, w2, b2 = params
    h = x @ w1 + b1
    mean = jnp.mean(h, axis=0, keepdims=True)
    var = jnp.mean((h - mean) ** 2, axis=0, keepdims=True)
    h = gamma * (h - mean) * jax.lax.rsqrt(var + BN_EPS) + beta
    h = jnp.maximum(h, 0.0)
    return h @ w2 + b2


if __name__ == "__main__":
    # Small but lane-/sublane-aligned shapes (dims multiples of 128, batch of 8).
    B, IN_DIM, HIDDEN_DIM, OUT_DIM = 16, 256, 128, 256

    key = jax.random.PRNGKey(0)
    k_x, k_p = jax.random.split(key)
    x = jax.random.normal(k_x, (B, IN_DIM), jnp.float32)
    params = make_params(k_p, IN_DIM, HIDDEN_DIM, OUT_DIM)

    out = jax.jit(mlp_forward)(x, params)
    jax.block_until_ready(out)

    assert out.shape == (B, OUT_DIM) and out.dtype == jnp.float32
    assert bool(jnp.all(jnp.isfinite(out)))

    # Loose tolerance: matmul operands are bf16 by design (see perf notes).
    ref = mlp_reference(x, params)
    max_err = float(jnp.max(jnp.abs(out - ref)))
    assert max_err < 0.15, f"max abs error {max_err} too large"

    print("KERNEL_OK")
</pallas_src>

<mosaic_0001>
module attributes {stable_mosaic.version = 11 : i64} {
  func.func @mlp_kernel(%arg0: memref<16x256xbf16, #tpu.memory_space<vmem>>, %arg1: memref<256x128xbf16, #tpu.memory_space<vmem>>, %arg2: memref<1x128xf32, #tpu.memory_space<vmem>>, %arg3: memref<1x128xf32, #tpu.memory_space<vmem>>, %arg4: memref<1x128xf32, #tpu.memory_space<vmem>>, %arg5: memref<128x256xbf16, #tpu.memory_space<vmem>>, %arg6: memref<1x256xf32, #tpu.memory_space<vmem>>, %arg7: memref<16x256xf32, #tpu.memory_space<vmem>>) attributes {dimension_semantics = [], scalar_prefetch = 0 : i64, scratch_operands = 0 : i64, tpu.core_type = #tpu.core_type<tc>} {
    %c0 = arith.constant 0 : index
    %c0_0 = arith.constant 0 : index
    %0 = vector.load %arg0[%c0, %c0_0] : memref<16x256xbf16, #tpu.memory_space<vmem>>, vector<16x256xbf16>
    %c0_1 = arith.constant 0 : index
    %c0_2 = arith.constant 0 : index
    %1 = vector.load %arg1[%c0_1, %c0_2] : memref<256x128xbf16, #tpu.memory_space<vmem>>, vector<256x128xbf16>
    %cst = arith.constant dense<0.000000e+00> : vector<16x128xf32>
    %2 = tpu.matmul %0, %1, %cst {dimension_numbers = #tpu.dot_dimension_numbers<[1], [0], [0], [1], [0, 0, 1, 1], [], []>} : vector<16x256xbf16>, vector<256x128xbf16>, vector<16x128xf32> -> vector<16x128xf32>
    %c0_3 = arith.constant 0 : index
    %c0_4 = arith.constant 0 : index
    %3 = vector.load %arg2[%c0_3, %c0_4] : memref<1x128xf32, #tpu.memory_space<vmem>>, vector<1x128xf32>
    %4 = vector.broadcast %3 : vector<1x128xf32> to vector<16x128xf32>
    %5 = arith.addf %2, %4 : vector<16x128xf32>
    %cst_5 = arith.constant dense<0.000000e+00> : vector<128xf32>
    %6 = vector.multi_reduction <add>, %5, %cst_5 [0] : vector<16x128xf32> to vector<128xf32>
    %7 = vector.shape_cast %6 : vector<128xf32> to vector<1x128xf32>
    %cst_6 = arith.constant 1.600000e+01 : f32
    %8 = vector.broadcast %cst_6 : f32 to vector<1x128xf32>
    %9 = arith.divf %7, %8 : vector<1x128xf32>
    %10 = vector.broadcast %9 : vector<1x128xf32> to vector<16x128xf32>
    %11 = arith.subf %5, %10 : vector<16x128xf32>
    %12 = arith.mulf %11, %11 : vector<16x128xf32>
    %cst_7 = arith.constant dense<0.000000e+00> : vector<128xf32>
    %13 = vector.multi_reduction <add>, %12, %cst_7 [0] : vector<16x128xf32> to vector<128xf32>
    %14 = vector.shape_cast %13 : vector<128xf32> to vector<1x128xf32>
    %cst_8 = arith.constant 1.600000e+01 : f32
    %15 = vector.broadcast %cst_8 : f32 to vector<1x128xf32>
    %16 = arith.divf %14, %15 : vector<1x128xf32>
    %17 = vector.broadcast %9 : vector<1x128xf32> to vector<16x128xf32>
    %18 = arith.subf %5, %17 : vector<16x128xf32>
    %cst_9 = arith.constant 9.99999974E-6 : f32
    %19 = vector.broadcast %cst_9 : f32 to vector<1x128xf32>
    %20 = arith.addf %16, %19 : vector<1x128xf32>
    %21 = math.rsqrt %20 : vector<1x128xf32>
    %22 = vector.broadcast %21 : vector<1x128xf32> to vector<16x128xf32>
    %23 = arith.mulf %18, %22 : vector<16x128xf32>
    %c0_10 = arith.constant 0 : index
    %c0_11 = arith.constant 0 : index
    %24 = vector.load %arg3[%c0_10, %c0_11] : memref<1x128xf32, #tpu.memory_space<vmem>>, vector<1x128xf32>
    %25 = vector.broadcast %24 : vector<1x128xf32> to vector<16x128xf32>
    %26 = arith.mulf %25, %23 : vector<16x128xf32>
    %c0_12 = arith.constant 0 : index
    %c0_13 = arith.constant 0 : index
    %27 = vector.load %arg4[%c0_12, %c0_13] : memref<1x128xf32, #tpu.memory_space<vmem>>, vector<1x128xf32>
    %28 = vector.broadcast %27 : vector<1x128xf32> to vector<16x128xf32>
    %29 = arith.addf %26, %28 : vector<16x128xf32>
    %cst_14 = arith.constant 0.000000e+00 : f32
    %30 = vector.broadcast %cst_14 : f32 to vector<16x128xf32>
    %31 = arith.maximumf %29, %30 : vector<16x128xf32>
    %32 = arith.truncf %31 : vector<16x128xf32> to vector<16x128xbf16>
    %c0_15 = arith.constant 0 : index
    %c0_16 = arith.constant 0 : index
    %33 = vector.load %arg5[%c0_15, %c0_16] : memref<128x256xbf16, #tpu.memory_space<vmem>>, vector<128x256xbf16>
    %cst_17 = arith.constant dense<0.000000e+00> : vector<16x256xf32>
    %34 = tpu.matmul %32, %33, %cst_17 {dimension_numbers = #tpu.dot_dimension_numbers<[1], [0], [0], [1], [0, 0, 1, 1], [], []>} : vector<16x128xbf16>, vector<128x256xbf16>, vector<16x256xf32> -> vector<16x256xf32>
    %c0_18 = arith.constant 0 : index
    %c0_19 = arith.constant 0 : index
    %35 = vector.load %arg6[%c0_18, %c0_19] : memref<1x256xf32, #tpu.memory_space<vmem>>, vector<1x256xf32>
    %36 = vector.broadcast %35 : vector<1x256xf32> to vector<16x256xf32>
    %37 = arith.addf %34, %36 : vector<16x256xf32>
    %c0_20 = arith.constant 0 : index
    %c0_21 = arith.constant 0 : index
    %38 = vector.load %arg7[%c0_20, %c0_21] : memref<16x256xf32, #tpu.memory_space<vmem>>, vector<16x256xf32>
    tpu.vector_store %arg7[%c0_20, %c0_21], %37 {strides = array<i32>} : memref<16x256xf32, #tpu.memory_space<vmem>>, vector<16x256xf32>,
    return
  }
}

</mosaic_0001>

<llo_original>
// kernel: mlp_forward.1
$region0: #{mlp_forward.1}
  #allocation0 [shape = 'u32[]', space=smem, size = 0x4, offset = 0x4, fixed_abs, tag = 'smem constant byte address 0x4 - core index']
  #allocation1 [shape = 'u32[144,128]{1,0:T(1,128)}', space=vmem, size = 0x12000, scoped, tag = 'internal scratch']
  %s0 = inlined_call_operand.vmem [shape: bf16[16,256], index: 0, kind: input, shape index: {}]
  %s1 = inlined_call_operand.vmem [shape: bf16[256,128], index: 1, kind: input, shape index: {}]
  %s2 = inlined_call_operand.vmem [shape: f32[1,128], index: 2, kind: input, shape index: {}]
  %s3 = inlined_call_operand.vmem [shape: f32[1,128], index: 3, kind: input, shape index: {}]
  %s4 = inlined_call_operand.vmem [shape: f32[1,128], index: 4, kind: input, shape index: {}]
  %s5 = inlined_call_operand.vmem [shape: bf16[128,256], index: 5, kind: input, shape index: {}]
  %s6 = inlined_call_operand.vmem [shape: f32[1,256], index: 6, kind: input, shape index: {}]
  %s7 = inlined_call_operand.hbm [shape: f32[16,256], index: 7, kind: output, shape index: {}]
  %s8 = sld [smem:[#allocation0]]
  $region38: #{mlp_forward.1} parent=0
    _
  %s10 = ssub.s32 1, %s8
  %s11 = scalar_select 0, %s10, %s8
  $region1: #{mlp_forward.1} parent=0
    #allocation2 [shape = 'u8[16384]{0}', space=vmem, size = 0x4000, scoped, tag = 'output window, operand 0, single buffered']
    #allocation3 [shape = 's32[1]{0}', space=sflag, size = 0x4, scoped, tag = 'scoped memory for mlp_forward.1']
    %12 = vsyncpa [#allocation3], 0
    // Predicated region
    $region2: #{mlp_forward.1} parent=1 // pred_check
      _
    $region3: #{mlp_forward.1} parent=1 // pred_check_branch
      %14 = sbr.rel (0) target = $region5
    $region4: #{mlp_forward.1} parent=1 // pred_region
      _
    $region5: #{mlp_forward.1} parent=1 // pred_fallthru
      _
    // Predicated region
    $region6: #{mlp_forward.1} parent=1 // pred_check
      _
    $region7: #{mlp_forward.1} parent=1 // pred_check_branch
      %16 = sbr.rel (0) target = $region9
    $region8: #{mlp_forward.1} parent=1 // pred_region
      _
    $region9: #{mlp_forward.1} parent=1 // pred_fallthru
      _
    // Predicated region
    $region10: #{mlp_forward.1} parent=1 // pred_check
      _
    $region11: #{mlp_forward.1} parent=1 // pred_check_branch
      %18 = sbr.rel (0) target = $region13
    $region12: #{mlp_forward.1} parent=1 // pred_region
      _
    $region13: #{mlp_forward.1} parent=1 // pred_fallthru
      _
    // Predicated region
    $region14: #{mlp_forward.1} parent=1 // pred_check
      _
    $region15: #{mlp_forward.1} parent=1 // pred_check_branch
      %20 = sbr.rel (0) target = $region17
    $region16: #{mlp_forward.1} parent=1 // pred_region
      _
    $region17: #{mlp_forward.1} parent=1 // pred_fallthru
      _
    // Predicated region
    $region18: #{mlp_forward.1} parent=1 // pred_check
      _
    $region19: #{mlp_forward.1} parent=1 // pred_check_branch
      %22 = sbr.rel (0) target = $region21
    $region20: #{mlp_forward.1} parent=1 // pred_region
      _
    $region21: #{mlp_forward.1} parent=1 // pred_fallthru
      _
    // Predicated region
    $region22: #{mlp_forward.1} parent=1 // pred_check
      _
    $region23: #{mlp_forward.1} parent=1 // pred_check_branch
      %24 = sbr.rel (0) target = $region25
    $region24: #{mlp_forward.1} parent=1 // pred_region
      _
    $region25: #{mlp_forward.1} parent=1 // pred_fallthru
      _
    // Predicated region
    $region26: #{mlp_forward.1} parent=1 // pred_check
      _
    $region27: #{mlp_forward.1} parent=1 // pred_check_branch
      %26 = sbr.rel (0) target = $region29
    $region28: #{mlp_forward.1} parent=1 // pred_region
      _
    $region29: #{mlp_forward.1} parent=1 // pred_fallthru
      _
    %v28 = vld [vmem:[%s0] sm:$0xff]
    %v29 = vld [vmem:[%s0 + $0x8] sm:$0xff]
    %v30 = vld [vmem:[%s1] sm:$0xf]
    %v31 = vld [vmem:[%s1 + $0x4] sm:$0xf]
    %v32 = vld [vmem:[%s1 + $0x8] sm:$0xf]
    %v33 = vld [vmem:[%s1 + $0xc] sm:$0xf]
    %v34 = vld [vmem:[%s1 + $0x10] sm:$0xf]
    %v35 = vld [vmem:[%s1 + $0x14] sm:$0xf]
    %v36 = vld [vmem:[%s1 + $0x18] sm:$0xf]
    %v37 = vld [vmem:[%s1 + $0x1c] sm:$0xf]
    %v38 = vld [vmem:[%s1 + $0x20] sm:$0xf]
    %v39 = vld [vmem:[%s1 + $0x24] sm:$0xf]
    %v40 = vld [vmem:[%s1 + $0x28] sm:$0xf]
    %v41 = vld [vmem:[%s1 + $0x2c] sm:$0xf]
    %v42 = vld [vmem:[%s1 + $0x30] sm:$0xf]
    %v43 = vld [vmem:[%s1 + $0x34] sm:$0xf]
    %v44 = vld [vmem:[%s1 + $0x38] sm:$0xf]
    %v45 = vld [vmem:[%s1 + $0x3c] sm:$0xf]
    %v46 = vld [vmem:[%s1 + $0x40] sm:$0xf]
    %v47 = vld [vmem:[%s1 + $0x44] sm:$0xf]
    %v48 = vld [vmem:[%s1 + $0x48] sm:$0xf]
    %v49 = vld [vmem:[%s1 + $0x4c] sm:$0xf]
    %v50 = vld [vmem:[%s1 + $0x50] sm:$0xf]
    %v51 = vld [vmem:[%s1 + $0x54] sm:$0xf]
    %v52 = vld [vmem:[%s1 + $0x58] sm:$0xf]
    %v53 = vld [vmem:[%s1 + $0x5c] sm:$0xf]
    %v54 = vld [vmem:[%s1 + $0x60] sm:$0xf]
    %v55 = vld [vmem:[%s1 + $0x64] sm:$0xf]
    %v56 = vld [vmem:[%s1 + $0x68] sm:$0xf]
    %v57 = vld [vmem:[%s1 + $0x6c] sm:$0xf]
    %v58 = vld [vmem:[%s1 + $0x70] sm:$0xf]
    %v59 = vld [vmem:[%s1 + $0x74] sm:$0xf]
    %v60 = vld [vmem:[%s1 + $0x78] sm:$0xf]
    %v61 = vld [vmem:[%s1 + $0x7c] sm:$0xf]
    %v62 = vld [vmem:[%s2] sm:$0x1]
    %v64 = vlaneseq
    %v65 = vshrl.u32 %v64, 7
    %v66 = vsub.s32 0, %v65
    %v67 = vrot.slane %v62, %v66
    %v71 = vunpack.c.l.b16 %v28
    %v72 = vunpack.c.h.b16 %v28
    %v73 = vunpack.c.l.b16 %v29
    %v74 = vunpack.c.h.b16 %v29
    %v75 = vpack.c.b16 %v73, %v71
    %v76 = vpack.c.b16 %v74, %v72
    %v111 = vunpack.c.l.b16 %v30
    %v112 = vunpack.c.l.b16 %v31
    %v113 = vunpack.c.l.b16 %v32
    %v114 = vunpack.c.l.b16 %v33
    %v115 = vunpack.c.l.b16 %v34
    %v116 = vunpack.c.l.b16 %v35
    %v117 = vunpack.c.l.b16 %v36
    %v118 = vunpack.c.l.b16 %v37
    %v119 = vunpack.c.l.b16 %v38
    %v120 = vunpack.c.l.b16 %v39
    %v121 = vunpack.c.l.b16 %v40
    %v122 = vunpack.c.l.b16 %v41
    %v123 = vunpack.c.l.b16 %v42
    %v124 = vunpack.c.l.b16 %v43
    %v125 = vunpack.c.l.b16 %v44
    %v126 = vunpack.c.l.b16 %v45
    %v127 = vunpack.c.l.b16 %v46
    %v128 = vunpack.c.l.b16 %v47
    %v129 = vunpack.c.l.b16 %v48
    %v130 = vunpack.c.l.b16 %v49
    %v131 = vunpack.c.l.b16 %v50
    %v132 = vunpack.c.l.b16 %v51
    %v133 = vunpack.c.l.b16 %v52
    %v134 = vunpack.c.l.b16 %v53
    %v135 = vunpack.c.l.b16 %v54
    %v136 = vunpack.c.l.b16 %v55
    %v137 = vunpack.c.l.b16 %v56
    %v138 = vunpack.c.l.b16 %v57
    %v139 = vunpack.c.l.b16 %v58
    %v140 = vunpack.c.l.b16 %v59
    %v141 = vunpack.c.l.b16 %v60
    %v142 = vunpack.c.l.b16 %v61
    %v143 = vpack.c.b16 %v112, %v111
    %v144 = vpack.c.b16 %v114, %v113
    %v145 = vpack.c.b16 %v116, %v115
    %v146 = vpack.c.b16 %v118, %v117
    %v147 = vpack.c.b16 %v120, %v119
    %v148 = vpack.c.b16 %v122, %v121
    %v149 = vpack.c.b16 %v124, %v123
    %v150 = vpack.c.b16 %v126, %v125
    %v151 = vpack.c.b16 %v128, %v127
    %v152 = vpack.c.b16 %v130, %v129
    %v153 = vpack.c.b16 %v132, %v131
    %v154 = vpack.c.b16 %v134, %v133
    %v155 = vpack.c.b16 %v136, %v135
    %v156 = vpack.c.b16 %v138, %v137
    %v157 = vpack.c.b16 %v140, %v139
    %v158 = vpack.c.b16 %v142, %v141
    %175 = vmatprep.subr.bf16.mxu0 0
    %176 = vmatpush1.bf16.msra.mxu0 %v143
    %177 = vmatprep.subr.bf16.mxu0 0
    %178 = vmatpush1.bf16.msra.mxu0 %v144
    %179 = vmatprep.subr.bf16.mxu0 0
    %180 = vmatpush1.bf16.msra.mxu0 %v145
    %181 = vmatprep.subr.bf16.mxu0 0
    %182 = vmatpush1.bf16.msra.mxu0 %v146
    %183 = vmatprep.subr.bf16.mxu0 0
    %184 = vmatpush1.bf16.msra.mxu0 %v147
    %185 = vmatprep.subr.bf16.mxu0 0
    %186 = vmatpush1.bf16.msra.mxu0 %v148
    %187 = vmatprep.subr.bf16.mxu0 0
    %188 = vmatpush1.bf16.msra.mxu0 %v149
    %189 = vmatprep.subr.bf16.mxu0 0
    %190 = vmatpush1.bf16.msra.mxu0 %v150
    %191 = vmatprep.subr.bf16.mxu0 0
    %192 = vmatpush1.bf16.msra.mxu0 %v151
    %193 = vmatprep.subr.bf16.mxu0 0
    %194 = vmatpush1.bf16.msra.mxu0 %v152
    %195 = vmatprep.subr.bf16.mxu0 0
    %196 = vmatpush1.bf16.msra.mxu0 %v153
    %197 = vmatprep.subr.bf16.mxu0 0
    %198 = vmatpush1.bf16.msra.mxu0 %v154
    %199 = vmatprep.subr.bf16.mxu0 0
    %200 = vmatpush1.bf16.msra.mxu0 %v155
    %201 = vmatprep.subr.bf16.mxu0 0
    %202 = vmatpush1.bf16.msra.mxu0 %v156
    %203 = vmatprep.subr.bf16.mxu0 0
    %204 = vmatpush1.bf16.msra.mxu0 %v157
    %205 = vmatprep.subr.bf16.mxu0 0
    %206 = vmatpush1.bf16.msra.mxu0 %v158
    %207 = vmatprep.mubr.bf16.mxu0 %v76
    %208 = vmatmul.mubr.bf16.gmra.mrb[0].mxu0 %v75
    %v209 = vpop.f32.mrb[0].mxu0
    %v210 = vadd.f32 %v67, %v209
    %v211 = vpop.f32.mrb[0].mxu0
    %v212 = vpop.f32.mrb[0].mxu0
    %v213 = vadd.f32 %v67, %v212
    %v214 = vpop.f32.mrb[0].mxu0
    %215 = vdwg.mxu0
    %v216 = vadd.f32 %v210, %v213
    %v217 = vrot.slane %v216, 4
    %v218 = vadd.f32 %v216, %v217
    %v219 = vrot.slane %v218, 2
    %v220 = vadd.f32 %v218, %v219
    %v221 = vrot.slane %v220, 1
    %v222 = vadd.f32 %v220, %v221
    %v223 = vrcp.pop 16.0
    %v224 = vmul.f32 %v222, %v223
    %v225 = vsub.f32 %v210, %v224
    %v226 = vsub.f32 %v213, %v224
    %v227 = vmul.f32 %v225, %v225
    %v228 = vmul.f32 %v226, %v226
    %v229 = vadd.f32 %v227, %v228
    %v230 = vrot.slane %v229, 4
    %v231 = vadd.f32 %v229, %v230
    %v232 = vrot.slane %v231, 2
    %v233 = vadd.f32 %v231, %v232
    %v234 = vrot.slane %v233, 1
    %v235 = vadd.f32 %v233, %v234
    %v236 = vmul.f32 %v235, %v223
    %v237 = vadd.f32 %v236, 1e-05
    %v238 = vrsqrt.pop %v237
    %v239 = vmul.f32 %v225, %v238
    %v240 = vmul.f32 %v226, %v238
    %v241 = vld [vmem:[%s3] sm:$0x1]
    %v243 = vlaneseq
    %v244 = vshrl.u32 %v243, 7
    %v245 = vsub.s32 0, %v244
    %v246 = vrot.slane %v241, %v245
    %v248 = vmul.f32 %v246, %v239
    %v249 = vmul.f32 %v246, %v240
    %v250 = vld [vmem:[%s4] sm:$0x1]
    %v252 = vlaneseq
    %v253 = vshrl.u32 %v252, 7
    %v254 = vsub.s32 0, %v253
    %v255 = vrot.slane %v250, %v254
    %v257 = vadd.f32 %v248, %v255
    %v258 = vadd.f32 %v249, %v255
    %v259 = vmax.f32 %v257, 0.0
    %v260 = vmax.f32 %v258, 0.0
    %v261 = vpack.c.bf16 %v260, %v259
    %v262 = vld [vmem:[%s5] sm:$0xff]
    %v263 = vld [vmem:[%s5 + $0x8] sm:$0xff]
    %v264 = vld [vmem:[%s5 + $0x10] sm:$0xff]
    %v265 = vld [vmem:[%s5 + $0x18] sm:$0xff]
    %v266 = vld [vmem:[%s5 + $0x20] sm:$0xff]
    %v267 = vld [vmem:[%s5 + $0x28] sm:$0xff]
    %v268 = vld [vmem:[%s5 + $0x30] sm:$0xff]
    %v269 = vld [vmem:[%s5 + $0x38] sm:$0xff]
    %v270 = vld [vmem:[%s5 + $0x40] sm:$0xff]
    %v271 = vld [vmem:[%s5 + $0x48] sm:$0xff]
    %v272 = vld [vmem:[%s5 + $0x50] sm:$0xff]
    %v273 = vld [vmem:[%s5 + $0x58] sm:$0xff]
    %v274 = vld [vmem:[%s5 + $0x60] sm:$0xff]
    %v275 = vld [vmem:[%s5 + $0x68] sm:$0xff]
    %v276 = vld [vmem:[%s5 + $0x70] sm:$0xff]
    %v277 = vld [vmem:[%s5 + $0x78] sm:$0xff]
    %v278 = vld [vmem:[%s6] sm:$0x3]
    %v280 = vlaneseq
    %v281 = vshrl.u32 %v280, 7
    %v282 = vsub.s32 0, %v281
    %v283 = vrot.slane %v278, %v282
    %v284 = vlaneseq
    %v285 = vshrl.u32 %v284, 7
    %v286 = vsub.s32 1, %v285
    %v287 = vrot.slane %v278, %v286
    %v306 = vunpack.c.l.b16 %v262
    %v307 = vunpack.c.h.b16 %v262
    %v308 = vunpack.c.l.b16 %v263
    %v309 = vunpack.c.h.b16 %v263
    %v310 = vunpack.c.l.b16 %v264
    %v311 = vunpack.c.h.b16 %v264
    %v312 = vunpack.c.l.b16 %v265
    %v313 = vunpack.c.h.b16 %v265
    %v314 = vunpack.c.l.b16 %v266
    %v315 = vunpack.c.h.b16 %v266
    %v316 = vunpack.c.l.b16 %v267
    %v317 = vunpack.c.h.b16 %v267
    %v318 = vunpack.c.l.b16 %v268
    %v319 = vunpack.c.h.b16 %v268
    %v320 = vunpack.c.l.b16 %v269
    %v321 = vunpack.c.h.b16 %v269
    %v322 = vunpack.c.l.b16 %v270
    %v323 = vunpack.c.h.b16 %v270
    %v324 = vunpack.c.l.b16 %v271
    %v325 = vunpack.c.h.b16 %v271
    %v326 = vunpack.c.l.b16 %v272
    %v327 = vunpack.c.h.b16 %v272
    %v328 = vunpack.c.l.b16 %v273
    %v329 = vunpack.c.h.b16 %v273
    %v330 = vunpack.c.l.b16 %v274
    %v331 = vunpack.c.h.b16 %v274
    %v332 = vunpack.c.l.b16 %v275
    %v333 = vunpack.c.h.b16 %v275
    %v334 = vunpack.c.l.b16 %v276
    %v335 = vunpack.c.h.b16 %v276
    %v336 = vunpack.c.l.b16 %v277
    %v337 = vunpack.c.h.b16 %v277
    %v338 = vpack.c.b16 %v308, %v306
    %v339 = vpack.c.b16 %v309, %v307
    %v340 = vpack.c.b16 %v312, %v310
    %v341 = vpack.c.b16 %v313, %v311
    %v342 = vpack.c.b16 %v316, %v314
    %v343 = vpack.c.b16 %v317, %v315
    %v344 = vpack.c.b16 %v320, %v318
    %v345 = vpack.c.b16 %v321, %v319
    %v346 = vpack.c.b16 %v324, %v322
    %v347 = vpack.c.b16 %v325, %v323
    %v348 = vpack.c.b16 %v328, %v326
    %v349 = vpack.c.b16 %v329, %v327
    %v350 = vpack.c.b16 %v332, %v330
    %v351 = vpack.c.b16 %v333, %v331
    %v352 = vpack.c.b16 %v336, %v334
    %v353 = vpack.c.b16 %v337, %v335
    %370 = vmatprep.subr.bf16.mxu0 %v339
    %371 = vmatpush1.bf16.msra.mxu0 %v338
    %372 = vmatprep.subr.bf16.mxu0 %v341
    %373 = vmatpush1.bf16.msra.mxu0 %v340
    %374 = vmatprep.subr.bf16.mxu0 %v343
    %375 = vmatpush1.bf16.msra.mxu0 %v342
    %376 = vmatprep.subr.bf16.mxu0 %v345
    %377 = vmatpush1.bf16.msra.mxu0 %v344
    %378 = vmatprep.subr.bf16.mxu0 %v347
    %379 = vmatpush1.bf16.msra.mxu0 %v346
    %380 = vmatprep.subr.bf16.mxu0 %v349
    %381 = vmatpush1.bf16.msra.mxu0 %v348
    %382 = vmatprep.subr.bf16.mxu0 %v351
    %383 = vmatpush1.bf16.msra.mxu0 %v350
    %384 = vmatprep.subr.bf16.mxu0 %v353
    %385 = vmatpush1.bf16.msra.mxu0 %v352
    %386 = vmatprep.subr.bf16.mxu0 0
    %387 = vmatpush1.bf16.msra.mxu0 0
    %388 = vmatprep.subr.bf16.mxu0 0
    %389 = vmatpush1.bf16.msra.mxu0 0
    %390 = vmatprep.subr.bf16.mxu0 0
    %391 = vmatpush1.bf16.msra.mxu0 0
    %392 = vmatprep.subr.bf16.mxu0 0
    %393 = vmatpush1.bf16.msra.mxu0 0
    %394 = vmatprep.subr.bf16.mxu0 0
    %395 = vmatpush1.bf16.msra.mxu0 0
    %396 = vmatprep.subr.bf16.mxu0 0
    %397 = vmatpush1.bf16.msra.mxu0 0
    %398 = vmatprep.subr.bf16.mxu0 0
    %399 = vmatpush1.bf16.msra.mxu0 0
    %400 = vmatprep.subr.bf16.mxu0 0
    %401 = vmatpush1.bf16.msra.mxu0 0
    %402 = vmatprep.mubr.bf16.mxu0 0
    %403 = vmatmul.mubr.bf16.gmra.mrb[0].mxu0 %v261
    %v404 = vpop.f32.mrb[0].mxu0
    %v405 = vadd.f32 %v283, %v404
    %v406 = vpop.f32.mrb[0].mxu0
    %v407 = vadd.f32 %v287, %v406
    %v408 = vpop.f32.mrb[0].mxu0
    %v409 = vadd.f32 %v283, %v408
    %v410 = vpop.f32.mrb[0].mxu0
    %v411 = vadd.f32 %v287, %v410
    %412 = vdwg.mxu0
    %413 = vst [vmem:[#allocation2] sm:$0xff] %v405
    %414 = vst [vmem:[#allocation2 + $0x8] sm:$0xff] %v407
    %415 = vst [vmem:[#allocation2 + $0x10] sm:$0xff] %v409
    %416 = vst [vmem:[#allocation2 + $0x18] sm:$0xff] %v411
    // Predicated region
    $region30: #{mlp_forward.1} parent=1 // pred_check
      _
    $region31: #{mlp_forward.1} parent=1 // pred_check_branch
      %418 = sbr.rel (0) target = $region33
    $region32: #{mlp_forward.1} parent=1 // pred_region
      %s420 = ssub.s32 512, 512
      %421 = vsyncadd [#allocation3], %s420
      %s422 = sshll.u32 [#allocation2], 4
      %s423 = int_to_ptr.vmem [resolvable:$true] %s422
      %428 = dma.vmem_to_hbm [thread:$0]  %s423, 512, %s7, [#allocation3], 256, 256, 16
    $region33: #{mlp_forward.1} parent=1 // pred_fallthru
      _
    // Predicated region
    $region34: #{mlp_forward.1} parent=1 // pred_check
      _
    $region35: #{mlp_forward.1} parent=1 // pred_check_branch
      %430 = sbr.rel (0) target = $region37
    $region36: #{mlp_forward.1} parent=1 // pred_region
      %431 = dma.done [#allocation3], 512
    $region37: #{mlp_forward.1} parent=1 // pred_fallthru
      _
    %432 = vsyncpa [#allocation3], 1

</llo_original>
